<compile_context>
chip_gen: v7x
topology: tpu7x:2x2x1
jax: 0.10.0
libtpu: 0.0.40
codegen_flags: <defaults>
</compile_context>

<pallas_src>
import functools

import jax
import jax.numpy as jnp
from jax.experimental import pallas as pl
from jax.experimental.pallas import tpu as pltpu

LN_EPS = 1e-5  # PyTorch nn.LayerNorm default


def _round_up(n, m):
    return ((n + m - 1) // m) * m


def _n_sub_chunks(tm):
    """Row sub-chunks per tile; independent chunks let LN (VPU) overlap GEMM (MXU)."""
    for n in (4, 2):
        if tm >= 128 * n and tm % (8 * n) == 0:
            return n
    return 1


def _const_block_spec(shape, single_buffer=True):
    """Spec for a grid-invariant operand.  Returns (spec, buffer_count)."""
    if single_buffer:
        try:
            return pl.BlockSpec(shape, lambda i: (0, 0), pipeline_mode=pl.Buffered(1)), 1
        except (TypeError, AttributeError):
            pass  # older jax without pipeline_mode / Buffered
    return pl.BlockSpec(shape, lambda i: (0, 0)), 2


def _layernorm(x, gamma, beta, h_true, hp):
    """LayerNorm over the last dim of a (rows, hp) tile whose columns >= h_true are exactly 0.

    Two-pass moments; each zero padded column contributes mean^2 to sum((x-mean)^2), which is
    removed analytically, so padded and unpadded paths are numerically equivalent.
    """
    inv_n = 1.0 / h_true
    mean = jnp.sum(x, axis=-1, keepdims=True) * inv_n
    d = x - mean
    sq = jnp.sum(d * d, axis=-1, keepdims=True)
    if hp != h_true:
        sq = sq - (hp - h_true) * (mean * mean)
    var = jnp.maximum(sq * inv_n, 0.0)
    return d * jax.lax.rsqrt(var + LN_EPS) * gamma + beta


def residual_block_kernel(x_ref, pv_ref, w1_ref, w2_ref, o_ref, *, h_true, hp, n_sub):
    # Packed (8, hp) parameter slab: rows = ln1_g, ln1_b, b1, ln2_g, ln2_b, b2, 0, 0.
    pv = pv_ref[...]
    g1, b1, bl1 = pv[0:1], pv[1:2], pv[2:3]
    g2, b2, bl2 = pv[3:4], pv[4:5], pv[5:6]

    w1 = w1_ref[...]
    w2 = w2_ref[...]
    mm_dtype = w1.dtype  # bf16 by default (f32 for strict accuracy)

    tm = x_ref.shape[0]
    sub = tm // n_sub
    # Static unrolled loop over independent row sub-chunks: the scheduler can co-issue the
    # VPU-heavy LN/ReLU of chunk i+1 under the MXU work of chunk i.
    for c in range(n_sub):
        r0 = c * sub
        x = x_ref[r0:r0 + sub, :].astype(jnp.float32)

        h = jnp.maximum(_layernorm(x, g1, b1, h_true, hp), 0.0)
        h = jnp.dot(h.astype(mm_dtype), w1, preferred_element_type=jnp.float32) + bl1
        h = jnp.maximum(_layernorm(h, g2, b2, h_true, hp), 0.0)
        # Dropout: identity (inference / eval mode).
        h = jnp.dot(h.astype(mm_dtype), w2, preferred_element_type=jnp.float32) + bl2

        # Residual add in f32, cast back to the output dtype.
        o_ref[r0:r0 + sub, :] = (x + h).astype(o_ref.dtype)


@functools.partial(jax.jit, static_argnames=("tm", "matmul_dtype", "single_buffer_consts"))
def residual_block(x, params, *, tm=512, matmul_dtype=jnp.bfloat16, single_buffer_consts=True):
    """x: (batch, seq, hidden) float32.  params: dict of f32 weights (see init_params)."""
    B, S, H = x.shape
    n_rows = B * S

    # Lane-dense hidden dim; 256-align larger H for the 2x256x256 MXUs on v6e/v7x.
    Hp = _round_up(H, 128)
    if Hp > 256 and Hp % 256 != 0:
        Hp = _round_up(H, 256)

    # Generation-aware VMEM ceiling (128 MiB v5e/v6e, 64 MiB v7x) with ~15% headroom.
    try:
        vmem_phys = int(pltpu.get_tpu_info().vmem_capacity_bytes)
    except Exception:
        vmem_phys = 64 * 1024 * 1024
    vmem_cap = int(vmem_phys * 0.85)

    # Grid-invariant operand specs (single-buffered when supported).
    pvec_spec, nb_p = _const_block_spec((8, Hp), single_buffer_consts)
    mat_spec, nb_w = _const_block_spec((Hp, Hp), single_buffer_consts)
    wbuf = max(nb_p, nb_w)

    w_itemsize = jnp.dtype(matmul_dtype).itemsize

    def footprint(tm_):
        sub = tm_ // _n_sub_chunks(tm_)
        return (2 * tm_ * Hp * 4                     # x tile (double-buffered)
                + 2 * tm_ * Hp * 4                   # out tile (double-buffered)
                + wbuf * 2 * Hp * Hp * w_itemsize    # W1, W2
                + wbuf * 8 * Hp * 4                  # packed LN/bias vectors
                + 8 * sub * Hp * 4)                  # live intermediates (~2 chunks x 4 f32 slabs)

    tm = max(8, (tm // 8) * 8)                       # sublane-aligned row tile
    rows8 = _round_up(n_rows, 8)
    tm_eff = min(tm, rows8)
    # Shrink the row tile until the footprint fits the (generation-specific) VMEM cap.
    while tm_eff > 64 and footprint(tm_eff) > vmem_cap:
        tm_eff = max(64, ((tm_eff // 2) // 8) * 8)

    # Keep >= 2 grid steps so both v7x TensorCores get work (harmless on v5e/v6e).
    if _round_up(n_rows, tm_eff) == tm_eff and rows8 >= 16:
        tm_eff = min(tm_eff, max(8, ((rows8 // 2) // 8) * 8))
    rows_p = _round_up(n_rows, tm_eff)
    n_sub = _n_sub_chunks(tm_eff)

    # --- padded, lane-dense operands (padded columns are exactly zero everywhere) -------
    x2d_p = jnp.pad(x.reshape(n_rows, H), ((0, rows_p - n_rows), (0, Hp - H)))
    pvec = jnp.concatenate(
        [params["ln1_g"], params["ln1_b"], params["b1"],
         params["ln2_g"], params["ln2_b"], params["b2"]], axis=0).astype(jnp.float32)
    pvec = jnp.pad(pvec, ((0, 8 - pvec.shape[0]), (0, Hp - H)))          # (8, Hp)
    w1 = jnp.pad(params["w1"], ((0, Hp - H), (0, Hp - H))).astype(matmul_dtype)
    w2 = jnp.pad(params["w2"], ((0, Hp - H), (0, Hp - H))).astype(matmul_dtype)

    row_spec = pl.BlockSpec((tm_eff, Hp), lambda i: (i, 0))
    vmem_limit = min(max(int(footprint(tm_eff) * 1.3) + (2 << 20), 16 << 20), vmem_cap)

    kernel = functools.partial(residual_block_kernel, h_true=H, hp=Hp, n_sub=n_sub)

    out = pl.pallas_call(
        kernel,
        out_shape=jax.ShapeDtypeStruct((rows_p, Hp), x.dtype),
        grid_spec=pltpu.PrefetchScalarGridSpec(
            num_scalar_prefetch=0,
            grid=(rows_p // tm_eff,),
            in_specs=[row_spec, pvec_spec, mat_spec, mat_spec],
            out_specs=row_spec,
        ),
        input_output_aliases={0: 0},                  # output reuses the padded-x HBM buffer
        compiler_params=pltpu.CompilerParams(
            dimension_semantics=("parallel",),
            vmem_limit_bytes=vmem_limit),
    )(x2d_p, pvec, w1, w2)

    return out[:n_rows, :H].reshape(B, S, H)


def init_params(hidden_dim, key):
    """Deterministic parameter init (matches PyTorch shapes; Linear stored as (in, out))."""
    k1, k2, k3, k4 = jax.random.split(key, 4)
    bound = 1.0 / jnp.sqrt(hidden_dim)
    return {
        # LayerNorm defaults: weight=1, bias=0
        "ln1_g": jnp.ones((1, hidden_dim), jnp.float32),
        "ln1_b": jnp.zeros((1, hidden_dim), jnp.float32),
        "ln2_g": jnp.ones((1, hidden_dim), jnp.float32),
        "ln2_b": jnp.zeros((1, hidden_dim), jnp.float32),
        # Linear layers: uniform(-1/sqrt(H), 1/sqrt(H)), stored as (in, out) so y = x @ W + b
        "w1": jax.random.uniform(k1, (hidden_dim, hidden_dim), jnp.float32, -bound, bound),
        "b1": jax.random.uniform(k2, (1, hidden_dim), jnp.float32, -bound, bound),
        "w2": jax.random.uniform(k3, (hidden_dim, hidden_dim), jnp.float32, -bound, bound),
        "b2": jax.random.uniform(k4, (1, hidden_dim), jnp.float32, -bound, bound),
    }


def _reference(x, p):
    """Pure-JAX f32 reference for sanity check."""
    def ln(v, g, b):
        m = jnp.mean(v, -1, keepdims=True)
        va = jnp.mean((v - m) ** 2, -1, keepdims=True)
        return (v - m) * jax.lax.rsqrt(va + LN_EPS) * g + b
    h = jnp.maximum(ln(x, p["ln1_g"], p["ln1_b"]), 0.0)
    h = h @ p["w1"] + p["b1"]
    h = jnp.maximum(ln(h, p["ln2_g"], p["ln2_b"]), 0.0)
    h = h @ p["w2"] + p["b2"]
    return x + h


if __name__ == "__main__":
    key = jax.random.PRNGKey(0)
    kx, kp = jax.random.split(key)

    batch, seq, hidden = 2, 8, 32
    x = jax.random.normal(kx, (batch, seq, hidden), jnp.float32)
    params = init_params(hidden, kp)

    ref = _reference(x, params)

    def _call(**kw):
        try:
            return jax.block_until_ready(residual_block(x, params, **kw))
        except Exception:
            # Fallback if this jax build rejects single-buffered (Buffered(1)) const operands.
            return jax.block_until_ready(
                residual_block(x, params, single_buffer_consts=False, **kw))

    # Strict-accuracy path (f32 GEMMs) — tight tolerance vs f32 reference.
    out_f32 = _call(matmul_dtype=jnp.float32)
    assert out_f32.shape == x.shape
    assert jnp.allclose(out_f32, ref, atol=1e-4, rtol=1e-4), "f32 path mismatch vs reference"

    # Default fast path (bf16 GEMM operands, f32 accumulate) — loosened tolerance.
    out_bf16 = _call()
    assert out_bf16.shape == x.shape
    assert jnp.allclose(out_bf16, ref, atol=3e-2, rtol=3e-2), "bf16 path mismatch vs reference"

    print("KERNEL_OK")
</pallas_src>

<mosaic_0001>
module attributes {stable_mosaic.version = 11 : i64} {
  func.func @residual_block_kernel(%arg0: i32, %arg1: memref<8x128xf32, #tpu.memory_space<vmem>>, %arg2: memref<8x128xf32, #tpu.memory_space<vmem>>, %arg3: memref<128x128xf32, #tpu.memory_space<vmem>>, %arg4: memref<128x128xf32, #tpu.memory_space<vmem>>, %arg5: memref<8x128xf32, #tpu.memory_space<vmem>>) attributes {dimension_semantics = [#tpu.dimension_semantics<parallel>], iteration_bounds = array<i64: 2>, scalar_prefetch = 0 : i64, scratch_operands = 0 : i64, tpu.core_type = #tpu.core_type<tc>, window_params = [{transform_indices = @transform_0, window_bounds = array<i64: 8, 128>}, {pipeline_mode = #tpu.pipeline_mode<synchronous>, transform_indices = @transform_1, window_bounds = array<i64: 8, 128>}, {pipeline_mode = #tpu.pipeline_mode<synchronous>, transform_indices = @transform_2, window_bounds = array<i64: 128, 128>}, {pipeline_mode = #tpu.pipeline_mode<synchronous>, transform_indices = @transform_3, window_bounds = array<i64: 128, 128>}, {transform_indices = @transform_4, window_bounds = array<i64: 8, 128>}]} {
    %c0 = arith.constant 0 : index
    %c0_0 = arith.constant 0 : index
    %0 = vector.load %arg2[%c0, %c0_0] : memref<8x128xf32, #tpu.memory_space<vmem>>, vector<8x128xf32>
    %1 = vector.extract_strided_slice %0 {offsets = [0, 0], sizes = [1, 128], strides = [1, 1]} : vector<8x128xf32> to vector<1x128xf32>
    %2 = vector.extract_strided_slice %0 {offsets = [1, 0], sizes = [1, 128], strides = [1, 1]} : vector<8x128xf32> to vector<1x128xf32>
    %3 = vector.extract_strided_slice %0 {offsets = [2, 0], sizes = [1, 128], strides = [1, 1]} : vector<8x128xf32> to vector<1x128xf32>
    %4 = vector.extract_strided_slice %0 {offsets = [3, 0], sizes = [1, 128], strides = [1, 1]} : vector<8x128xf32> to vector<1x128xf32>
    %5 = vector.extract_strided_slice %0 {offsets = [4, 0], sizes = [1, 128], strides = [1, 1]} : vector<8x128xf32> to vector<1x128xf32>
    %6 = vector.extract_strided_slice %0 {offsets = [5, 0], sizes = [1, 128], strides = [1, 1]} : vector<8x128xf32> to vector<1x128xf32>
    %c0_1 = arith.constant 0 : index
    %c0_2 = arith.constant 0 : index
    %7 = vector.load %arg3[%c0_1, %c0_2] : memref<128x128xf32, #tpu.memory_space<vmem>>, vector<128x128xf32>
    %c0_3 = arith.constant 0 : index
    %c0_4 = arith.constant 0 : index
    %8 = vector.load %arg4[%c0_3, %c0_4] : memref<128x128xf32, #tpu.memory_space<vmem>>, vector<128x128xf32>
    %c0_5 = arith.constant 0 : index
    %c0_6 = arith.constant 0 : index
    %9 = vector.load %arg1[%c0_5, %c0_6] : memref<8x128xf32, #tpu.memory_space<vmem>>, vector<8x128xf32>
    %cst = arith.constant dense<0.000000e+00> : vector<8xf32>
    %10 = vector.multi_reduction <add>, %9, %cst [1] : vector<8x128xf32> to vector<8xf32>
    %11 = vector.shape_cast %10 : vector<8xf32> to vector<8x1xf32>
    %cst_7 = arith.constant 3.125000e-02 : f32
    %12 = vector.broadcast %cst_7 : f32 to vector<8x1xf32>
    %13 = arith.mulf %11, %12 : vector<8x1xf32>
    %14 = vector.broadcast %13 : vector<8x1xf32> to vector<8x128xf32>
    %15 = arith.subf %9, %14 : vector<8x128xf32>
    %16 = arith.mulf %15, %15 : vector<8x128xf32>
    %cst_8 = arith.constant dense<0.000000e+00> : vector<8xf32>
    %17 = vector.multi_reduction <add>, %16, %cst_8 [1] : vector<8x128xf32> to vector<8xf32>
    %18 = vector.shape_cast %17 : vector<8xf32> to vector<8x1xf32>
    %19 = arith.mulf %13, %13 : vector<8x1xf32>
    %cst_9 = arith.constant 9.600000e+01 : f32
    %20 = vector.broadcast %cst_9 : f32 to vector<8x1xf32>
    %21 = arith.mulf %20, %19 : vector<8x1xf32>
    %22 = arith.subf %18, %21 : vector<8x1xf32>
    %cst_10 = arith.constant 3.125000e-02 : f32
    %23 = vector.broadcast %cst_10 : f32 to vector<8x1xf32>
    %24 = arith.mulf %22, %23 : vector<8x1xf32>
    %cst_11 = arith.constant 0.000000e+00 : f32
    %25 = vector.broadcast %cst_11 : f32 to vector<8x1xf32>
    %26 = arith.maximumf %24, %25 : vector<8x1xf32>
    %cst_12 = arith.constant 9.99999974E-6 : f32
    %27 = vector.broadcast %cst_12 : f32 to vector<8x1xf32>
    %28 = arith.addf %26, %27 : vector<8x1xf32>
    %29 = math.rsqrt %28 : vector<8x1xf32>
    %30 = vector.broadcast %29 : vector<8x1xf32> to vector<8x128xf32>
    %31 = arith.mulf %15, %30 : vector<8x128xf32>
    %32 = vector.broadcast %1 : vector<1x128xf32> to vector<8x128xf32>
    %33 = arith.mulf %31, %32 : vector<8x128xf32>
    %34 = vector.broadcast %2 : vector<1x128xf32> to vector<8x128xf32>
    %35 = arith.addf %33, %34 : vector<8x128xf32>
    %cst_13 = arith.constant 0.000000e+00 : f32
    %36 = vector.broadcast %cst_13 : f32 to vector<8x128xf32>
    %37 = arith.maximumf %35, %36 : vector<8x128xf32>
    %cst_14 = arith.constant dense<0.000000e+00> : vector<8x128xf32>
    %38 = tpu.matmul %37, %7, %cst_14 {dimension_numbers = #tpu.dot_dimension_numbers<[1], [0], [0], [1], [0, 0, 1, 1], [], []>} : vector<8x128xf32>, vector<128x128xf32>, vector<8x128xf32> -> vector<8x128xf32>
    %39 = vector.broadcast %3 : vector<1x128xf32> to vector<8x128xf32>
    %40 = arith.addf %38, %39 : vector<8x128xf32>
    %cst_15 = arith.constant dense<0.000000e+00> : vector<8xf32>
    %41 = vector.multi_reduction <add>, %40, %cst_15 [1] : vector<8x128xf32> to vector<8xf32>
    %42 = vector.shape_cast %41 : vector<8xf32> to vector<8x1xf32>
    %cst_16 = arith.constant 3.125000e-02 : f32
    %43 = vector.broadcast %cst_16 : f32 to vector<8x1xf32>
    %44 = arith.mulf %42, %43 : vector<8x1xf32>
    %45 = vector.broadcast %44 : vector<8x1xf32> to vector<8x128xf32>
    %46 = arith.subf %40, %45 : vector<8x128xf32>
    %47 = arith.mulf %46, %46 : vector<8x128xf32>
    %cst_17 = arith.constant dense<0.000000e+00> : vector<8xf32>
    %48 = vector.multi_reduction <add>, %47, %cst_17 [1] : vector<8x128xf32> to vector<8xf32>
    %49 = vector.shape_cast %48 : vector<8xf32> to vector<8x1xf32>
    %50 = arith.mulf %44, %44 : vector<8x1xf32>
    %cst_18 = arith.constant 9.600000e+01 : f32
    %51 = vector.broadcast %cst_18 : f32 to vector<8x1xf32>
    %52 = arith.mulf %51, %50 : vector<8x1xf32>
    %53 = arith.subf %49, %52 : vector<8x1xf32>
    %cst_19 = arith.constant 3.125000e-02 : f32
    %54 = vector.broadcast %cst_19 : f32 to vector<8x1xf32>
    %55 = arith.mulf %53, %54 : vector<8x1xf32>
    %cst_20 = arith.constant 0.000000e+00 : f32
    %56 = vector.broadcast %cst_20 : f32 to vector<8x1xf32>
    %57 = arith.maximumf %55, %56 : vector<8x1xf32>
    %cst_21 = arith.constant 9.99999974E-6 : f32
    %58 = vector.broadcast %cst_21 : f32 to vector<8x1xf32>
    %59 = arith.addf %57, %58 : vector<8x1xf32>
    %60 = math.rsqrt %59 : vector<8x1xf32>
    %61 = vector.broadcast %60 : vector<8x1xf32> to vector<8x128xf32>
    %62 = arith.mulf %46, %61 : vector<8x128xf32>
    %63 = vector.broadcast %4 : vector<1x128xf32> to vector<8x128xf32>
    %64 = arith.mulf %62, %63 : vector<8x128xf32>
    %65 = vector.broadcast %5 : vector<1x128xf32> to vector<8x128xf32>
    %66 = arith.addf %64, %65 : vector<8x128xf32>
    %cst_22 = arith.constant 0.000000e+00 : f32
    %67 = vector.broadcast %cst_22 : f32 to vector<8x128xf32>
    %68 = arith.maximumf %66, %67 : vector<8x128xf32>
    %cst_23 = arith.constant dense<0.000000e+00> : vector<8x128xf32>
    %69 = tpu.matmul %68, %8, %cst_23 {dimension_numbers = #tpu.dot_dimension_numbers<[1], [0], [0], [1], [0, 0, 1, 1], [], []>} : vector<8x128xf32>, vector<128x128xf32>, vector<8x128xf32> -> vector<8x128xf32>
    %70 = vector.broadcast %6 : vector<1x128xf32> to vector<8x128xf32>
    %71 = arith.addf %69, %70 : vector<8x128xf32>
    %72 = arith.addf %9, %71 : vector<8x128xf32>
    %c0_24 = arith.constant 0 : index
    %c0_25 = arith.constant 0 : index
    %73 = vector.load %arg5[%c0_24, %c0_25] : memref<8x128xf32, #tpu.memory_space<vmem>>, vector<8x128xf32>
    tpu.vector_store %arg5[%c0_24, %c0_25], %72 {strides = array<i32>} : memref<8x128xf32, #tpu.memory_space<vmem>>, vector<8x128xf32>,
    return
  }
  func.func @transform_0(%arg0: i32) -> (i32, i32) {
    %c0_i32 = arith.constant 0 : i32
    %c0_i32_0 = arith.constant 0 : i32
    return %arg0, %c0_i32 : i32, i32
  }
  func.func @transform_1(%arg0: i32) -> (i32, i32) {
    %c0_i32 = arith.constant 0 : i32
    %c0_i32_0 = arith.constant 0 : i32
    %c0_i32_1 = arith.constant 0 : i32
    return %c0_i32, %c0_i32_0 : i32, i32
  }
  func.func @transform_2(%arg0: i32) -> (i32, i32) {
    %c0_i32 = arith.constant 0 : i32
    %c0_i32_0 = arith.constant 0 : i32
    %c0_i32_1 = arith.constant 0 : i32
    return %c0_i32, %c0_i32_0 : i32, i32
  }
  func.func @transform_3(%arg0: i32) -> (i32, i32) {
    %c0_i32 = arith.constant 0 : i32
    %c0_i32_0 = arith.constant 0 : i32
    %c0_i32_1 = arith.constant 0 : i32
    return %c0_i32, %c0_i32_0 : i32, i32
  }
  func.func @transform_4(%arg0: i32) -> (i32, i32) {
    %c0_i32 = arith.constant 0 : i32
    %c0_i32_0 = arith.constant 0 : i32
    return %arg0, %c0_i32 : i32, i32
  }
}

module attributes {stable_mosaic.version = 11 : i64} {
  func.func @residual_block_kernel(%arg0: i32, %arg1: memref<8x128xf32, #tpu.memory_space<vmem>>, %arg2: memref<8x128xf32, #tpu.memory_space<vmem>>, %arg3: memref<128x128xf32, #tpu.memory_space<vmem>>, %arg4: memref<128x128xf32, #tpu.memory_space<vmem>>, %arg5: memref<8x128xf32, #tpu.memory_space<vmem>>) attributes {dimension_semantics = [#tpu.dimension_semantics<parallel>], iteration_bounds = array<i64: 2>, scalar_prefetch = 0 : i64, scratch_operands = 0 : i64, tpu.core_type = #tpu.core_type<tc>, window_params = [{transform_indices = @transform_0, window_bounds = array<i64: 8, 128>}, {pipeline_mode = #tpu.pipeline_mode<synchronous>, transform_indices = @transform_1, window_bounds = array<i64: 8, 128>}, {pipeline_mode = #tpu.pipeline_mode<synchronous>, transform_indices = @transform_2, window_bounds = array<i64: 128, 128>}, {pipeline_mode = #tpu.pipeline_mode<synchronous>, transform_indices = @transform_3, window_bounds = array<i64: 128, 128>}, {transform_indices = @transform_4, window_bounds = array<i64: 8, 128>}]} {
    %c0 = arith.constant 0 : index
    %c0_0 = arith.constant 0 : index
    %0 = vector.load %arg2[%c0, %c0_0] : memref<8x128xf32, #tpu.memory_space<vmem>>, vector<8x128xf32>
    %1 = vector.extract_strided_slice %0 {offsets = [0, 0], sizes = [1, 128], strides = [1, 1]} : vector<8x128xf32> to vector<1x128xf32>
    %2 = vector.extract_strided_slice %0 {offsets = [1, 0], sizes = [1, 128], strides = [1, 1]} : vector<8x128xf32> to vector<1x128xf32>
    %3 = vector.extract_strided_slice %0 {offsets = [2, 0], sizes = [1, 128], strides = [1, 1]} : vector<8x128xf32> to vector<1x128xf32>
    %4 = vector.extract_strided_slice %0 {offsets = [3, 0], sizes = [1, 128], strides = [1, 1]} : vector<8x128xf32> to vector<1x128xf32>
    %5 = vector.extract_strided_slice %0 {offsets = [4, 0], sizes = [1, 128], strides = [1, 1]} : vector<8x128xf32> to vector<1x128xf32>
    %6 = vector.extract_strided_slice %0 {offsets = [5, 0], sizes = [1, 128], strides = [1, 1]} : vector<8x128xf32> to vector<1x128xf32>
    %c0_1 = arith.constant 0 : index
    %c0_2 = arith.constant 0 : index
    %7 = vector.load %arg3[%c0_1, %c0_2] : memref<128x128xf32, #tpu.memory_space<vmem>>, vector<128x128xf32>
    %c0_3 = arith.constant 0 : index
    %c0_4 = arith.constant 0 : index
    %8 = vector.load %arg4[%c0_3, %c0_4] : memref<128x128xf32, #tpu.memory_space<vmem>>, vector<128x128xf32>
    %c0_5 = arith.constant 0 : index
    %c0_6 = arith.constant 0 : index
    %9 = vector.load %arg1[%c0_5, %c0_6] : memref<8x128xf32, #tpu.memory_space<vmem>>, vector<8x128xf32>
    %cst = arith.constant dense<0.000000e+00> : vector<8xf32>
    %10 = vector.multi_reduction <add>, %9, %cst [1] : vector<8x128xf32> to vector<8xf32>
    %11 = vector.shape_cast %10 : vector<8xf32> to vector<8x1xf32>
    %cst_7 = arith.constant 3.125000e-02 : f32
    %12 = vector.broadcast %cst_7 : f32 to vector<8x1xf32>
    %13 = arith.mulf %11, %12 : vector<8x1xf32>
    %14 = vector.broadcast %13 : vector<8x1xf32> to vector<8x128xf32>
    %15 = arith.subf %9, %14 : vector<8x128xf32>
    %16 = arith.mulf %15, %15 : vector<8x128xf32>
    %cst_8 = arith.constant dense<0.000000e+00> : vector<8xf32>
    %17 = vector.multi_reduction <add>, %16, %cst_8 [1] : vector<8x128xf32> to vector<8xf32>
    %18 = vector.shape_cast %17 : vector<8xf32> to vector<8x1xf32>
    %19 = arith.mulf %13, %13 : vector<8x1xf32>
    %cst_9 = arith.constant 9.600000e+01 : f32
    %20 = vector.broadcast %cst_9 : f32 to vector<8x1xf32>
    %21 = arith.mulf %20, %19 : vector<8x1xf32>
    %22 = arith.subf %18, %21 : vector<8x1xf32>
    %cst_10 = arith.constant 3.125000e-02 : f32
    %23 = vector.broadcast %cst_10 : f32 to vector<8x1xf32>
    %24 = arith.mulf %22, %23 : vector<8x1xf32>
    %cst_11 = arith.constant 0.000000e+00 : f32
    %25 = vector.broadcast %cst_11 : f32 to vector<8x1xf32>
    %26 = arith.maximumf %24, %25 : vector<8x1xf32>
    %cst_12 = arith.constant 9.99999974E-6 : f32
    %27 = vector.broadcast %cst_12 : f32 to vector<8x1xf32>
    %28 = arith.addf %26, %27 : vector<8x1xf32>
    %29 = math.rsqrt %28 : vector<8x1xf32>
    %30 = vector.broadcast %29 : vector<8x1xf32> to vector<8x128xf32>
    %31 = arith.mulf %15, %30 : vector<8x128xf32>
    %32 = vector.broadcast %1 : vector<1x128xf32> to vector<8x128xf32>
    %33 = arith.mulf %31, %32 : vector<8x128xf32>
    %34 = vector.broadcast %2 : vector<1x128xf32> to vector<8x128xf32>
    %35 = arith.addf %33, %34 : vector<8x128xf32>
    %cst_13 = arith.constant 0.000000e+00 : f32
    %36 = vector.broadcast %cst_13 : f32 to vector<8x128xf32>
    %37 = arith.maximumf %35, %36 : vector<8x128xf32>
    %cst_14 = arith.constant dense<0.000000e+00> : vector<8x128xf32>
    %38 = tpu.matmul %37, %7, %cst_14 {dimension_numbers = #tpu.dot_dimension_numbers<[1], [0], [0], [1], [0, 0, 1, 1], [], []>} : vector<8x128xf32>, vector<128x128xf32>, vector<8x128xf32> -> vector<8x128xf32>
    %39 = vector.broadcast %3 : vector<1x128xf32> to vector<8x128xf32>
    %40 = arith.addf %38, %39 : vector<8x128xf32>
    %cst_15 = arith.constant dense<0.000000e+00> : vector<8xf32>
    %41 = vector.multi_reduction <add>, %40, %cst_15 [1] : vector<8x128xf32> to vector<8xf32>
    %42 = vector.shape_cast %41 : vector<8xf32> to vector<8x1xf32>
    %cst_16 = arith.constant 3.125000e-02 : f32
    %43 = vector.broadcast %cst_16 : f32 to vector<8x1xf32>
    %44 = arith.mulf %42, %43 : vector<8x1xf32>
    %45 = vector.broadcast %44 : vector<8x1xf32> to vector<8x128xf32>
    %46 = arith.subf %40, %45 : vector<8x128xf32>
    %47 = arith.mulf %46, %46 : vector<8x128xf32>
    %cst_17 = arith.constant dense<0.000000e+00> : vector<8xf32>
    %48 = vector.multi_reduction <add>, %47, %cst_17 [1] : vector<8x128xf32> to vector<8xf32>
    %49 = vector.shape_cast %48 : vector<8xf32> to vector<8x1xf32>
    %50 = arith.mulf %44, %44 : vector<8x1xf32>
    %cst_18 = arith.constant 9.600000e+01 : f32
    %51 = vector.broadcast %cst_18 : f32 to vector<8x1xf32>
    %52 = arith.mulf %51, %50 : vector<8x1xf32>
    %53 = arith.subf %49, %52 : vector<8x1xf32>
    %cst_19 = arith.constant 3.125000e-02 : f32
    %54 = vector.broadcast %cst_19 : f32 to vector<8x1xf32>
    %55 = arith.mulf %53, %54 : vector<8x1xf32>
    %cst_20 = arith.constant 0.000000e+00 : f32
    %56 = vector.broadcast %cst_20 : f32 to vector<8x1xf32>
    %57 = arith.maximumf %55, %56 : vector<8x1xf32>
    %cst_21 = arith.constant 9.99999974E-6 : f32
    %58 = vector.broadcast %cst_21 : f32 to vector<8x1xf32>
    %59 = arith.addf %57, %58 : vector<8x1xf32>
    %60 = math.rsqrt %59 : vector<8x1xf32>
    %61 = vector.broadcast %60 : vector<8x1xf32> to vector<8x128xf32>
    %62 = arith.mulf %46, %61 : vector<8x128xf32>
    %63 = vector.broadcast %4 : vector<1x128xf32> to vector<8x128xf32>
    %64 = arith.mulf %62, %63 : vector<8x128xf32>
    %65 = vector.broadcast %5 : vector<1x128xf32> to vector<8x128xf32>
    %66 = arith.addf %64, %65 : vector<8x128xf32>
    %cst_22 = arith.constant 0.000000e+00 : f32
    %67 = vector.broadcast %cst_22 : f32 to vector<8x128xf32>
    %68 = arith.maximumf %66, %67 : vector<8x128xf32>
    %cst_23 = arith.constant dense<0.000000e+00> : vector<8x128xf32>
    %69 = tpu.matmul %68, %8, %cst_23 {dimension_numbers = #tpu.dot_dimension_numbers<[1], [0], [0], [1], [0, 0, 1, 1], [], []>} : vector<8x128xf32>, vector<128x128xf32>, vector<8x128xf32> -> vector<8x128xf32>
    %70 = vector.broadcast %6 : vector<1x128xf32> to vector<8x128xf32>
    %71 = arith.addf %69, %70 : vector<8x128xf32>
    %72 = arith.addf %9, %71 : vector<8x128xf32>
    %c0_24 = arith.constant 0 : index
    %c0_25 = arith.constant 0 : index
    %73 = vector.load %arg5[%c0_24, %c0_25] : memref<8x128xf32, #tpu.memory_space<vmem>>, vector<8x128xf32>
    tpu.vector_store %arg5[%c0_24, %c0_25], %72 {strides = array<i32>} : memref<8x128xf32, #tpu.memory_space<vmem>>, vector<8x128xf32>,
    return
  }
  func.func @transform_0(%arg0: i32) -> (i32, i32) {
    %c0_i32 = arith.constant 0 : i32
    %c0_i32_0 = arith.constant 0 : i32
    return %arg0, %c0_i32 : i32, i32
  }
  func.func @transform_1(%arg0: i32) -> (i32, i32) {
    %c0_i32 = arith.constant 0 : i32
    %c0_i32_0 = arith.constant 0 : i32
    %c0_i32_1 = arith.constant 0 : i32
    return %c0_i32, %c0_i32_0 : i32, i32
  }
  func.func @transform_2(%arg0: i32) -> (i32, i32) {
    %c0_i32 = arith.constant 0 : i32
    %c0_i32_0 = arith.constant 0 : i32
    %c0_i32_1 = arith.constant 0 : i32
    return %c0_i32, %c0_i32_0 : i32, i32
  }
  func.func @transform_3(%arg0: i32) -> (i32, i32) {
    %c0_i32 = arith.constant 0 : i32
    %c0_i32_0 = arith.constant 0 : i32
    %c0_i32_1 = arith.constant 0 : i32
    return %c0_i32, %c0_i32_0 : i32, i32
  }
  func.func @transform_4(%arg0: i32) -> (i32, i32) {
    %c0_i32 = arith.constant 0 : i32
    %c0_i32_0 = arith.constant 0 : i32
    return %arg0, %c0_i32 : i32, i32
  }
}

</mosaic_0001>

<llo_original>
// kernel: residual_block.1
$region0: #{residual_block.1}
  #allocation0 [shape = 'u32[]', space=smem, size = 0x4, offset = 0x4, fixed_abs, tag = 'smem constant byte address 0x4 - core index']
  #allocation1 [shape = 'u32[144,128]{1,0:T(1,128)}', space=vmem, size = 0x12000, scoped, tag = 'internal scratch']
  %s0 = inlined_call_operand.vmem [shape: f32[16,128], index: 0, kind: input, shape index: {}, may-alias: {0,4}]
  %s1 = inlined_call_operand.vmem [shape: f32[8,128], index: 1, kind: input, shape index: {}]
  %s2 = inlined_call_operand.vmem [shape: f32[128,128], index: 2, kind: input, shape index: {}]
  %s3 = inlined_call_operand.vmem [shape: f32[128,128], index: 3, kind: input, shape index: {}]
  %s4 = inlined_call_operand.vmem [shape: f32[16,128], index: 4, kind: output, shape index: {}, may-alias: {0,4}]
  %s5 = sld [smem:[#allocation0]]
  $region49: #{residual_block.1} parent=0
    _
  %s7 = ssub.s32 1, %s5
  %s8 = scalar_select 0, %s7, %s5
  loop: start=0, step=1, limit=4
  $region2: #{residual_block.1} parent=0 // loop_pre_header
    _
  $region3: #{residual_block.1} parent=0 // loop_header
    %s10 = sphi 0, %s14
    %p11 = scmp.ge.s32.totalorder %s10, 4
    %s20 = sphi 0, %s22
    %s23 = sphi 0, %s20
    %s24 = sphi 0, %s23
    %s40 = sphi 0, %s24
    %s44 = sphi 0, %s44
    %s46 = sphi 0, %s44
    %s47 = sphi 0, %s46
    %s61 = sphi 0, %s47
    %s65 = sphi 0, %s65
    %s67 = sphi 0, %s65
    %s68 = sphi 0, %s67
    %s82 = sphi 0, %s68
    %s86 = sphi 0, %s86
    %s88 = sphi 0, %s86
    %s89 = sphi 0, %s88
    %s103 = sphi 0, %s89
    %s109 = sphi 0, %s111
    %s112 = sphi 0, %s109
    %s113 = sphi 0, %s112
    %s129 = sphi 0, %s113
  $region4: #{residual_block.1} parent=0 // loop_header_branch
    %13 = sbr.rel (%p11) target = $region8
  $region5: #{residual_block.1} parent=0 // loop_body
    %s15 = ssub.s32 %s10, 1
    %s16 = ssub.s32 %s10, 2
    %s17 = sadd.s32 %s10, 1
    %s18 = ssub.s32 %s10, %s17
    %p19 = scmp.eq.s32.totalorder %s18, 0
    %s21 = sadd.s32 %s20, 1
    %s22 = scalar_select %p19, %s20, %s21
    %p25 = pneg %p19
    %p26 = scmp.eq.s32.totalorder %s10, 1
    %p27 = por %p25, %p26
    %p28 = scmp.ne.s32.totalorder %s20, %s23
    %p29 = scmp.eq.s32.totalorder %s10, 0
    %p30 = por %p28, %p29
    %p31 = scmp.ne.s32.totalorder %s20, %s23
    %p32 = scmp.eq.s32.totalorder %s15, 1
    %p33 = por %p31, %p32
    %p34 = scmp.ne.s32.totalorder %s23, %s24
    %p35 = scmp.eq.s32.totalorder %s15, 0
    %p36 = por %p34, %p35
    %p37 = scmp.ne.s32.totalorder %s23, %s24
    %p38 = scmp.eq.s32.totalorder %s16, 1
    %p39 = por %p37, %p38
    %p41 = scmp.ne.s32.totalorder %s24, %s40
    %p42 = scmp.eq.s32.totalorder %s16, 0
    %p43 = por %p41, %p42
    %s45 = sadd.s32 %s44, 1
    %p48 = scmp.eq.s32.totalorder %s10, 1
    %p49 = scmp.ne.s32.totalorder %s44, %s46
    %p50 = scmp.eq.s32.totalorder %s10, 0
    %p51 = por %p49, %p50
    %p52 = scmp.ne.s32.totalorder %s44, %s46
    %p53 = scmp.eq.s32.totalorder %s15, 1
    %p54 = por %p52, %p53
    %p55 = scmp.ne.s32.totalorder %s46, %s47
    %p56 = scmp.eq.s32.totalorder %s15, 0
    %p57 = por %p55, %p56
    %p58 = scmp.ne.s32.totalorder %s46, %s47
    %p59 = scmp.eq.s32.totalorder %s16, 1
    %p60 = por %p58, %p59
    %p62 = scmp.ne.s32.totalorder %s47, %s61
    %p63 = scmp.eq.s32.totalorder %s16, 0
    %p64 = por %p62, %p63
    %s66 = sadd.s32 %s65, 1
    %p69 = scmp.eq.s32.totalorder %s10, 1
    %p70 = scmp.ne.s32.totalorder %s65, %s67
    %p71 = scmp.eq.s32.totalorder %s10, 0
    %p72 = por %p70, %p71
    %p73 = scmp.ne.s32.totalorder %s65, %s67
    %p74 = scmp.eq.s32.totalorder %s15, 1
    %p75 = por %p73, %p74
    %p76 = scmp.ne.s32.totalorder %s67, %s68
    %p77 = scmp.eq.s32.totalorder %s15, 0
    %p78 = por %p76, %p77
    %p79 = scmp.ne.s32.totalorder %s67, %s68
    %p80 = scmp.eq.s32.totalorder %s16, 1
    %p81 = por %p79, %p80
    %p83 = scmp.ne.s32.totalorder %s68, %s82
    %p84 = scmp.eq.s32.totalorder %s16, 0
    %p85 = por %p83, %p84
    %s87 = sadd.s32 %s86, 1
    %p90 = scmp.eq.s32.totalorder %s10, 1
    %p91 = scmp.ne.s32.totalorder %s86, %s88
    %p92 = scmp.eq.s32.totalorder %s10, 0
    %p93 = por %p91, %p92
    %p94 = scmp.ne.s32.totalorder %s86, %s88
    %p95 = scmp.eq.s32.totalorder %s15, 1
    %p96 = por %p94, %p95
    %p97 = scmp.ne.s32.totalorder %s88, %s89
    %p98 = scmp.eq.s32.totalorder %s15, 0
    %p99 = por %p97, %p98
    %p100 = scmp.ne.s32.totalorder %s88, %s89
    %p101 = scmp.eq.s32.totalorder %s16, 1
    %p102 = por %p100, %p101
    %p104 = scmp.ne.s32.totalorder %s89, %s103
    %p105 = scmp.eq.s32.totalorder %s16, 0
    %p106 = por %p104, %p105
    %s107 = ssub.s32 %s10, %s17
    %p108 = scmp.eq.s32.totalorder %s107, 0
    %s110 = sadd.s32 %s109, 1
    %s111 = scalar_select %p108, %s109, %s110
    %p114 = pneg %p108
    %p115 = scmp.eq.s32.totalorder %s10, 1
    %p116 = por %p114, %p115
    %p117 = scmp.ne.s32.totalorder %s109, %s112
    %p118 = scmp.eq.s32.totalorder %s10, 0
    %p119 = por %p117, %p118
    %p120 = scmp.ne.s32.totalorder %s109, %s112
    %p121 = scmp.eq.s32.totalorder %s15, 1
    %p122 = por %p120, %p121
    %p123 = scmp.ne.s32.totalorder %s112, %s113
    %p124 = scmp.eq.s32.totalorder %s15, 0
    %p125 = por %p123, %p124
    %p126 = scmp.ne.s32.totalorder %s112, %s113
    %p127 = scmp.eq.s32.totalorder %s16, 1
    %p128 = por %p126, %p127
    %p130 = scmp.ne.s32.totalorder %s113, %s129
    %p131 = scmp.eq.s32.totalorder %s16, 0
    %p132 = por %p130, %p131
    %p133 = scmp.le.s32.totalorder 1, %s10
    %p134 = scmp.lt.s32.totalorder %s10, 3
    %p135 = pnand %p133, %p134
    %p136 = pneg %p135
    // Predicated region
    $region9: #{residual_block.1} parent=5 // pred_check
      _
    $region10: #{residual_block.1} parent=5 // pred_check_branch
      %138 = sbr.rel (%p135) target = $region12
    $region11: #{residual_block.1} parent=5 // pred_region
      %s139 = ssub.s32 %s10, 1
      // Predicated region
      $region13: #{residual_block.1} parent=11 // pred_check
        %p140 = pneg %p57
      $region14: #{residual_block.1} parent=11 // pred_check_branch
        %142 = sbr.rel (%p140) target = $region16
      $region15: #{residual_block.1} parent=11 // pred_region
        _
      $region16: #{residual_block.1} parent=11 // pred_fallthru
        _
      // Predicated region
      $region17: #{residual_block.1} parent=11 // pred_check
        %p143 = pneg %p78
      $region18: #{residual_block.1} parent=11 // pred_check_branch
        %145 = sbr.rel (%p143) target = $region20
      $region19: #{residual_block.1} parent=11 // pred_region
        _
      $region20: #{residual_block.1} parent=11 // pred_fallthru
        _
      // Predicated region
      $region21: #{residual_block.1} parent=11 // pred_check
        %p146 = pneg %p99
      $region22: #{residual_block.1} parent=11 // pred_check_branch
        %148 = sbr.rel (%p146) target = $region24
      $region23: #{residual_block.1} parent=11 // pred_region
        _
      $region24: #{residual_block.1} parent=11 // pred_fallthru
        _
    $region12: #{residual_block.1} parent=5 // pred_fallthru
      _
    %p149 = scmp.lt.s32.totalorder %s10, 2
    // Predicated region
    $region25: #{residual_block.1} parent=5 // pred_check
      %p150 = pneg %p149
    $region26: #{residual_block.1} parent=5 // pred_check_branch
      %152 = sbr.rel (%p150) target = $region28
    $region27: #{residual_block.1} parent=5 // pred_region
      // Predicated region
      $region29: #{residual_block.1} parent=27 // pred_check
        %p153 = pneg %p30
      $region30: #{residual_block.1} parent=27 // pred_check_branch
        %155 = sbr.rel (%p153) target = $region32
      $region31: #{residual_block.1} parent=27 // pred_region
        %p156 = scmp.lt.s32.totalorder %s10, 1
        %s157 = scalar_select %p156, %s10, 1
        %s158 = smul.addr %s157, 8
        %s159 = scalar_lea.vmem %s0, %s158
      $region32: #{residual_block.1} parent=27 // pred_fallthru
        _
    $region28: #{residual_block.1} parent=5 // pred_fallthru
      _
    %p160 = scmp.le.s32.totalorder 1, %s10
    %p161 = scmp.lt.s32.totalorder %s10, 3
    %p162 = pnand %p160, %p161
    %p163 = pneg %p162
    // Predicated region
    $region33: #{residual_block.1} parent=5 // pred_check
      _
    $region34: #{residual_block.1} parent=5 // pred_check_branch
      %165 = sbr.rel (%p162) target = $region36
    $region35: #{residual_block.1} parent=5 // pred_region
      %s166 = ssub.s32 %s10, 1
      %p167 = scmp.lt.s32.totalorder %s15, 1
      %s168 = scalar_select %p167, %s15, 1
      %s169 = smul.addr %s168, 8
      %s170 = scalar_lea.vmem %s0, %s169
      %p171 = pneg %p36
      %p172 = pneg %p33
      %p173 = pneg %p57
      %p174 = pneg %p54
      %p175 = pneg %p78
      %p176 = pneg %p75
      %p177 = pneg %p99
      %p178 = pneg %p96
      %p179 = pneg %p125
      %p180 = pneg %p122
      %p181 = scmp.lt.s32.totalorder %s15, 1
      %s182 = scalar_select %p181, %s15, 1
      %s183 = smul.addr %s182, 8
      %s184 = scalar_lea.vmem %s4, %s183
      %p185 = scmp.lt.s32.totalorder %s15, 1
      %s186 = scalar_select %p185, %s15, 1
      %s187 = smul.addr %s186, 8
      %s188 = scalar_lea.vmem %s0, %s187
      %p189 = scmp.lt.s32.totalorder %s15, 1
      %s190 = scalar_select %p189, %s15, 1
      %s191 = smul.addr %s190, 8
      %s192 = scalar_lea.vmem %s4, %s191
      %v193 = vld [vmem:[%s1] sm:$0xff]
      %v194 = vld [vmem:[%s2] sm:$0xff]
      %v195 = vld [vmem:[%s2 + $0x8] sm:$0xff]
      %v196 = vld [vmem:[%s2 + $0x10] sm:$0xff]
      %v197 = vld [vmem:[%s2 + $0x18] sm:$0xff]
      %v198 = vld [vmem:[%s2 + $0x20] sm:$0xff]
      %v199 = vld [vmem:[%s2 + $0x28] sm:$0xff]
      %v200 = vld [vmem:[%s2 + $0x30] sm:$0xff]
      %v201 = vld [vmem:[%s2 + $0x38] sm:$0xff]
      %v202 = vld [vmem:[%s2 + $0x40] sm:$0xff]
      %v203 = vld [vmem:[%s2 + $0x48] sm:$0xff]
      %v204 = vld [vmem:[%s2 + $0x50] sm:$0xff]
      %v205 = vld [vmem:[%s2 + $0x58] sm:$0xff]
      %v206 = vld [vmem:[%s2 + $0x60] sm:$0xff]
      %v207 = vld [vmem:[%s2 + $0x68] sm:$0xff]
      %v208 = vld [vmem:[%s2 + $0x70] sm:$0xff]
      %v209 = vld [vmem:[%s2 + $0x78] sm:$0xff]
      %v210 = vld [vmem:[%s3] sm:$0xff]
      %v211 = vld [vmem:[%s3 + $0x8] sm:$0xff]
      %v212 = vld [vmem:[%s3 + $0x10] sm:$0xff]
      %v213 = vld [vmem:[%s3 + $0x18] sm:$0xff]
      %v214 = vld [vmem:[%s3 + $0x20] sm:$0xff]
      %v215 = vld [vmem:[%s3 + $0x28] sm:$0xff]
      %v216 = vld [vmem:[%s3 + $0x30] sm:$0xff]
      %v217 = vld [vmem:[%s3 + $0x38] sm:$0xff]
      %v218 = vld [vmem:[%s3 + $0x40] sm:$0xff]
      %v219 = vld [vmem:[%s3 + $0x48] sm:$0xff]
      %v220 = vld [vmem:[%s3 + $0x50] sm:$0xff]
      %v221 = vld [vmem:[%s3 + $0x58] sm:$0xff]
      %v222 = vld [vmem:[%s3 + $0x60] sm:$0xff]
      %v223 = vld [vmem:[%s3 + $0x68] sm:$0xff]
      %v224 = vld [vmem:[%s3 + $0x70] sm:$0xff]
      %v225 = vld [vmem:[%s3 + $0x78] sm:$0xff]
      %v226 = vld [vmem:[%s188] sm:$0xff]
      %227 = vadd.xlane.f32.xlu0 %v226
      %v228 = vpop.xlane.xlu0 %227
      %v229 = vmul.f32 %v228, 0.03125
      %v230 = vsub.f32 %v226, %v229
      %v231 = vmul.f32 %v230, %v230
      %232 = vadd.xlane.f32.xlu0 %v231
      %v233 = vpop.xlane.xlu0 %232
      %v234 = vmul.f32 %v229, %v229
      %v235 = vmul.f32 %v234, 96.0
      %v236 = vsub.f32 %v233, %v235
      %v237 = vmul.f32 %v236, 0.03125
      %v238 = vmax.f32 %v237, 0.0
      %v239 = vadd.f32 %v238, 1e-05
      %v240 = vrsqrt.pop %v239
      %v241 = vmul.f32 %v230, %v240
      %v242 = vlaneseq
      %v243 = vshrl.u32 %v242, 7
      %v244 = vsub.s32 0, %v243
      %v245 = vrot.slane %v193, %v244
      %v246 = vmul.f32 %v241, %v245
      %v247 = vlaneseq
      %v248 = vshrl.u32 %v247, 7
      %v249 = vsub.s32 1, %v248
      %v250 = vrot.slane %v193, %v249
      %v251 = vadd.f32 %v246, %v250
      %v252 = vmax.f32 %v251, 0.0
      %v253 = vlaneseq
      %v254 = vshrl.u32 %v253, 7
      %v255 = vsub.s32 2, %v254
      %v256 = vrot.slane %v193, %v255
      %257 = vmatprep.subr.mxu0 0.0
      %258 = vmatpush1.msra.mxu0 %v194
      %259 = vmatprep.subr.mxu0 0.0
      %260 = vmatpush1.msra.mxu0 %v195
      %261 = vmatprep.subr.mxu0 0.0
      %262 = vmatpush1.msra.mxu0 %v196
      %263 = vmatprep.subr.mxu0 0.0
      %264 = vmatpush1.msra.mxu0 %v197
      %265 = vmatprep.subr.mxu0 0.0
      %266 = vmatpush1.msra.mxu0 %v198
      %267 = vmatprep.subr.mxu0 0.0
      %268 = vmatpush1.msra.mxu0 %v199
      %269 = vmatprep.subr.mxu0 0.0
      %270 = vmatpush1.msra.mxu0 %v200
      %271 = vmatprep.subr.mxu0 0.0
      %272 = vmatpush1.msra.mxu0 %v201
      %273 = vmatprep.subr.mxu0 0.0
      %274 = vmatpush1.msra.mxu0 %v202
      %275 = vmatprep.subr.mxu0 0.0
      %276 = vmatpush1.msra.mxu0 %v203
      %277 = vmatprep.subr.mxu0 0.0
      %278 = vmatpush1.msra.mxu0 %v204
      %279 = vmatprep.subr.mxu0 0.0
      %280 = vmatpush1.msra.mxu0 %v205
      %281 = vmatprep.subr.mxu0 0.0
      %282 = vmatpush1.msra.mxu0 %v206
      %283 = vmatprep.subr.mxu0 0.0
      %284 = vmatpush1.msra.mxu0 %v207
      %285 = vmatprep.subr.mxu0 0.0
      %286 = vmatpush1.msra.mxu0 %v208
      %287 = vmatprep.subr.mxu0 0.0
      %288 = vmatpush1.msra.mxu0 %v209
      %289 = vmatprep.subr.mxu0 0.0
      %290 = vmatpush1.msra.mxu0 0.0
      %291 = vmatprep.subr.mxu0 0.0
      %292 = vmatpush1.msra.mxu0 0.0
      %293 = vmatprep.subr.mxu0 0.0
      %294 = vmatpush1.msra.mxu0 0.0
      %295 = vmatprep.subr.mxu0 0.0
      %296 = vmatpush1.msra.mxu0 0.0
      %297 = vmatprep.subr.mxu0 0.0
      %298 = vmatpush1.msra.mxu0 0.0
      %299 = vmatprep.subr.mxu0 0.0
      %300 = vmatpush1.msra.mxu0 0.0
      %301 = vmatprep.subr.mxu0 0.0
      %302 = vmatpush1.msra.mxu0 0.0
      %303 = vmatprep.subr.mxu0 0.0
      %304 = vmatpush1.msra.mxu0 0.0
      %305 = vmatprep.subr.mxu0 0.0
      %306 = vmatpush1.msra.mxu0 0.0
      %307 = vmatprep.subr.mxu0 0.0
      %308 = vmatpush1.msra.mxu0 0.0
      %309 = vmatprep.subr.mxu0 0.0
      %310 = vmatpush1.msra.mxu0 0.0
      %311 = vmatprep.subr.mxu0 0.0
      %312 = vmatpush1.msra.mxu0 0.0
      %313 = vmatprep.subr.mxu0 0.0
      %314 = vmatpush1.msra.mxu0 0.0
      %315 = vmatprep.subr.mxu0 0.0
      %316 = vmatpush1.msra.mxu0 0.0
      %317 = vmatprep.subr.mxu0 0.0
      %318 = vmatpush1.msra.mxu0 0.0
      %319 = vmatprep.subr.mxu0 0.0
      %320 = vmatpush1.msra.mxu0 0.0
      %321 = vmatprep.mubr.f32.mxu0 0.0
      %322 = vmatmul.mubr.f32.gmra.mrb[0].mxu0 %v252
      %v323 = vpop.f32.mrb[0].mxu0
      %v324 = vadd.f32 %v256, %v323
      %v325 = vpop.f32.mrb[0].mxu0
      %326 = vdwg.mxu0
      %327 = vadd.xlane.f32.xlu0 %v324
      %v328 = vpop.xlane.xlu0 %327
      %v329 = vmul.f32 %v328, 0.03125
      %v330 = vsub.f32 %v324, %v329
      %v331 = vmul.f32 %v330, %v330
      %332 = vadd.xlane.f32.xlu0 %v331
      %v333 = vpop.xlane.xlu0 %332
      %v334 = vmul.f32 %v329, %v329
      %v335 = vmul.f32 %v334, 96.0
      %v336 = vsub.f32 %v333, %v335
      %v337 = vmul.f32 %v336, 0.03125
      %v338 = vmax.f32 %v337, 0.0
      %v339 = vadd.f32 %v338, 1e-05
      %v340 = vrsqrt.pop %v339
      %v341 = vmul.f32 %v330, %v340
      %v342 = vlaneseq
      %v343 = vshrl.u32 %v342, 7
      %v344 = vsub.s32 3, %v343
      %v345 = vrot.slane %v193, %v344
      %v346 = vmul.f32 %v341, %v345
      %v347 = vlaneseq
      %v348 = vshrl.u32 %v347, 7
      %v349 = vsub.s32 4, %v348
      %v350 = vrot.slane %v193, %v349
      %v351 = vadd.f32 %v346, %v350
      %v352 = vmax.f32 %v351, 0.0
      %v353 = vlaneseq
      %v354 = vshrl.u32 %v353, 7
      %v355 = vsub.s32 5, %v354
      %v356 = vrot.slane %v193, %v355
      %357 = vmatprep.subr.mxu0 0.0
      %358 = vmatpush1.msra.mxu0 %v210
      %359 = vmatprep.subr.mxu0 0.0
      %360 = vmatpush1.msra.mxu0 %v211
      %361 = vmatprep.subr.mxu0 0.0
      %362 = vmatpush1.msra.mxu0 %v212
      %363 = vmatprep.subr.mxu0 0.0
      %364 = vmatpush1.msra.mxu0 %v213
      %365 = vmatprep.subr.mxu0 0.0
      %366 = vmatpush1.msra.mxu0 %v214
      %367 = vmatprep.subr.mxu0 0.0
      %368 = vmatpush1.msra.mxu0 %v215
      %369 = vmatprep.subr.mxu0 0.0
      %370 = vmatpush1.msra.mxu0 %v216
      %371 = vmatprep.subr.mxu0 0.0
      %372 = vmatpush1.msra.mxu0 %v217
      %373 = vmatprep.subr.mxu0 0.0
      %374 = vmatpush1.msra.mxu0 %v218
      %375 = vmatprep.subr.mxu0 0.0
      %376 = vmatpush1.msra.mxu0 %v219
      %377 = vmatprep.subr.mxu0 0.0
      %378 = vmatpush1.msra.mxu0 %v220
      %379 = vmatprep.subr.mxu0 0.0
      %380 = vmatpush1.msra.mxu0 %v221
      %381 = vmatprep.subr.mxu0 0.0
      %382 = vmatpush1.msra.mxu0 %v222
      %383 = vmatprep.subr.mxu0 0.0
      %384 = vmatpush1.msra.mxu0 %v223
      %385 = vmatprep.subr.mxu0 0.0
      %386 = vmatpush1.msra.mxu0 %v224
      %387 = vmatprep.subr.mxu0 0.0
      %388 = vmatpush1.msra.mxu0 %v225
      %389 = vmatprep.subr.mxu0 0.0
      %390 = vmatpush1.msra.mxu0 0.0
      %391 = vmatprep.subr.mxu0 0.0
      %392 = vmatpush1.msra.mxu0 0.0
      %393 = vmatprep.subr.mxu0 0.0
      %394 = vmatpush1.msra.mxu0 0.0
      %395 = vmatprep.subr.mxu0 0.0
      %396 = vmatpush1.msra.mxu0 0.0
      %397 = vmatprep.subr.mxu0 0.0
      %398 = vmatpush1.msra.mxu0 0.0
      %399 = vmatprep.subr.mxu0 0.0
      %400 = vmatpush1.msra.mxu0 0.0
      %401 = vmatprep.subr.mxu0 0.0
      %402 = vmatpush1.msra.mxu0 0.0
      %403 = vmatprep.subr.mxu0 0.0
      %404 = vmatpush1.msra.mxu0 0.0
      %405 = vmatprep.subr.mxu0 0.0
      %406 = vmatpush1.msra.mxu0 0.0
      %407 = vmatprep.subr.mxu0 0.0
      %408 = vmatpush1.msra.mxu0 0.0
      %409 = vmatprep.subr.mxu0 0.0
      %410 = vmatpush1.msra.mxu0 0.0
      %411 = vmatprep.subr.mxu0 0.0
      %412 = vmatpush1.msra.mxu0 0.0
      %413 = vmatprep.subr.mxu0 0.0
      %414 = vmatpush1.msra.mxu0 0.0
      %415 = vmatprep.subr.mxu0 0.0
      %416 = vmatpush1.msra.mxu0 0.0
      %417 = vmatprep.subr.mxu0 0.0
      %418 = vmatpush1.msra.mxu0 0.0
      %419 = vmatprep.subr.mxu0 0.0
      %420 = vmatpush1.msra.mxu0 0.0
      %421 = vmatprep.mubr.f32.mxu0 0.0
      %422 = vmatmul.mubr.f32.gmra.mrb[0].mxu0 %v352
      %v423 = vpop.f32.mrb[0].mxu0
      %v424 = vadd.f32 %v356, %v423
      %v425 = vpop.f32.mrb[0].mxu0
      %426 = vdwg.mxu0
      %v427 = vadd.f32 %v226, %v424
      %428 = vst [vmem:[%s192] sm:$0xff] %v427
      %p429 = scmp.lt.s32.totalorder %s15, 1
      %s430 = scalar_select %p429, %s15, 1
      %s431 = smul.addr %s430, 8
      %s432 = scalar_lea.vmem %s4, %s431
      // Predicated region
      $region37: #{residual_block.1} parent=35 // pred_check
        %p433 = pneg %p122
      $region38: #{residual_block.1} parent=35 // pred_check_branch
        %435 = sbr.rel (%p433) target = $region40
      $region39: #{residual_block.1} parent=35 // pred_region
        _
      $region40: #{residual_block.1} parent=35 // pred_fallthru
        _
    $region36: #{residual_block.1} parent=5 // pred_fallthru
      _
    %p436 = scmp.le.s32.totalorder 2, %s10
    // Predicated region
    $region41: #{residual_block.1} parent=5 // pred_check
      %p437 = pneg %p436
    $region42: #{residual_block.1} parent=5 // pred_check_branch
      %439 = sbr.rel (%p437) target = $region44
    $region43: #{residual_block.1} parent=5 // pred_region
      %s440 = ssub.s32 %s10, 2
      // Predicated region
      $region45: #{residual_block.1} parent=43 // pred_check
        %p441 = pneg %p128
      $region46: #{residual_block.1} parent=43 // pred_check_branch
        %443 = sbr.rel (%p441) target = $region48
      $region47: #{residual_block.1} parent=43 // pred_region
        %p444 = scmp.lt.s32.totalorder %s16, 1
        %s445 = scalar_select %p444, %s16, 1
        %s446 = smul.addr %s445, 8
        %s447 = scalar_lea.vmem %s4, %s446
      $region48: #{residual_block.1} parent=43 // pred_fallthru
        _
    $region44: #{residual_block.1} parent=5 // pred_fallthru
      _
  $region6: #{residual_block.1} parent=0 // loop_footer
    %s14 = sadd.s32 1, %s10
  $region7: #{residual_block.1} parent=0 // loop_footer_branch
    %9 = sbr.rel target = $region3
  $region8: #{residual_block.1} parent=0 // loop_exit
    _

// kernel: residual_block.1
$region0: #{residual_block.1}
  #allocation0 [shape = 'u32[]', space=smem, size = 0x4, offset = 0x4, fixed_abs, tag = 'smem constant byte address 0x4 - core index']
  #allocation1 [shape = 'u32[144,128]{1,0:T(1,128)}', space=vmem, size = 0x12000, scoped, tag = 'internal scratch']
  %s0 = inlined_call_operand.vmem [shape: f32[16,128], index: 0, kind: input, shape index: {}, may-alias: {0,4}]
  %s1 = inlined_call_operand.vmem [shape: f32[8,128], index: 1, kind: input, shape index: {}]
  %s2 = inlined_call_operand.vmem [shape: f32[128,128], index: 2, kind: input, shape index: {}]
  %s3 = inlined_call_operand.vmem [shape: f32[128,128], index: 3, kind: input, shape index: {}]
  %s4 = inlined_call_operand.vmem [shape: f32[16,128], index: 4, kind: output, shape index: {}, may-alias: {0,4}]
  %s5 = sld [smem:[#allocation0]]
  $region49: #{residual_block.1} parent=0
    _
  %s7 = ssub.s32 1, %s5
  %s8 = scalar_select 0, %s7, %s5
  loop: start=0, step=1, limit=4
  $region2: #{residual_block.1} parent=0 // loop_pre_header
    _
  $region3: #{residual_block.1} parent=0 // loop_header
    %s10 = sphi 0, %s14
    %p11 = scmp.ge.s32.totalorder %s10, 4
    %s20 = sphi 0, %s22
    %s23 = sphi 0, %s20
    %s24 = sphi 0, %s23
    %s40 = sphi 0, %s24
    %s44 = sphi 0, %s44
    %s46 = sphi 0, %s44
    %s47 = sphi 0, %s46
    %s61 = sphi 0, %s47
    %s65 = sphi 0, %s65
    %s67 = sphi 0, %s65
    %s68 = sphi 0, %s67
    %s82 = sphi 0, %s68
    %s86 = sphi 0, %s86
    %s88 = sphi 0, %s86
    %s89 = sphi 0, %s88
    %s103 = sphi 0, %s89
    %s109 = sphi 0, %s111
    %s112 = sphi 0, %s109
    %s113 = sphi 0, %s112
    %s129 = sphi 0, %s113
  $region4: #{residual_block.1} parent=0 // loop_header_branch
    %13 = sbr.rel (%p11) target = $region8
  $region5: #{residual_block.1} parent=0 // loop_body
    %s15 = ssub.s32 %s10, 1
    %s16 = ssub.s32 %s10, 2
    %s17 = sadd.s32 %s10, 1
    %s18 = ssub.s32 %s10, %s17
    %p19 = scmp.eq.s32.totalorder %s18, 0
    %s21 = sadd.s32 %s20, 1
    %s22 = scalar_select %p19, %s20, %s21
    %p25 = pneg %p19
    %p26 = scmp.eq.s32.totalorder %s10, 1
    %p27 = por %p25, %p26
    %p28 = scmp.ne.s32.totalorder %s20, %s23
    %p29 = scmp.eq.s32.totalorder %s10, 0
    %p30 = por %p28, %p29
    %p31 = scmp.ne.s32.totalorder %s20, %s23
    %p32 = scmp.eq.s32.totalorder %s15, 1
    %p33 = por %p31, %p32
    %p34 = scmp.ne.s32.totalorder %s23, %s24
    %p35 = scmp.eq.s32.totalorder %s15, 0
    %p36 = por %p34, %p35
    %p37 = scmp.ne.s32.totalorder %s23, %s24
    %p38 = scmp.eq.s32.totalorder %s16, 1
    %p39 = por %p37, %p38
    %p41 = scmp.ne.s32.totalorder %s24, %s40
    %p42 = scmp.eq.s32.totalorder %s16, 0
    %p43 = por %p41, %p42
    %s45 = sadd.s32 %s44, 1
    %p48 = scmp.eq.s32.totalorder %s10, 1
    %p49 = scmp.ne.s32.totalorder %s44, %s46
    %p50 = scmp.eq.s32.totalorder %s10, 0
    %p51 = por %p49, %p50
    %p52 = scmp.ne.s32.totalorder %s44, %s46
    %p53 = scmp.eq.s32.totalorder %s15, 1
    %p54 = por %p52, %p53
    %p55 = scmp.ne.s32.totalorder %s46, %s47
    %p56 = scmp.eq.s32.totalorder %s15, 0
    %p57 = por %p55, %p56
    %p58 = scmp.ne.s32.totalorder %s46, %s47
    %p59 = scmp.eq.s32.totalorder %s16, 1
    %p60 = por %p58, %p59
    %p62 = scmp.ne.s32.totalorder %s47, %s61
    %p63 = scmp.eq.s32.totalorder %s16, 0
    %p64 = por %p62, %p63
    %s66 = sadd.s32 %s65, 1
    %p69 = scmp.eq.s32.totalorder %s10, 1
    %p70 = scmp.ne.s32.totalorder %s65, %s67
    %p71 = scmp.eq.s32.totalorder %s10, 0
    %p72 = por %p70, %p71
    %p73 = scmp.ne.s32.totalorder %s65, %s67
    %p74 = scmp.eq.s32.totalorder %s15, 1
    %p75 = por %p73, %p74
    %p76 = scmp.ne.s32.totalorder %s67, %s68
    %p77 = scmp.eq.s32.totalorder %s15, 0
    %p78 = por %p76, %p77
    %p79 = scmp.ne.s32.totalorder %s67, %s68
    %p80 = scmp.eq.s32.totalorder %s16, 1
    %p81 = por %p79, %p80
    %p83 = scmp.ne.s32.totalorder %s68, %s82
    %p84 = scmp.eq.s32.totalorder %s16, 0
    %p85 = por %p83, %p84
    %s87 = sadd.s32 %s86, 1
    %p90 = scmp.eq.s32.totalorder %s10, 1
    %p91 = scmp.ne.s32.totalorder %s86, %s88
    %p92 = scmp.eq.s32.totalorder %s10, 0
    %p93 = por %p91, %p92
    %p94 = scmp.ne.s32.totalorder %s86, %s88
    %p95 = scmp.eq.s32.totalorder %s15, 1
    %p96 = por %p94, %p95
    %p97 = scmp.ne.s32.totalorder %s88, %s89
    %p98 = scmp.eq.s32.totalorder %s15, 0
    %p99 = por %p97, %p98
    %p100 = scmp.ne.s32.totalorder %s88, %s89
    %p101 = scmp.eq.s32.totalorder %s16, 1
    %p102 = por %p100, %p101
    %p104 = scmp.ne.s32.totalorder %s89, %s103
    %p105 = scmp.eq.s32.totalorder %s16, 0
    %p106 = por %p104, %p105
    %s107 = ssub.s32 %s10, %s17
    %p108 = scmp.eq.s32.totalorder %s107, 0
    %s110 = sadd.s32 %s109, 1
    %s111 = scalar_select %p108, %s109, %s110
    %p114 = pneg %p108
    %p115 = scmp.eq.s32.totalorder %s10, 1
    %p116 = por %p114, %p115
    %p117 = scmp.ne.s32.totalorder %s109, %s112
    %p118 = scmp.eq.s32.totalorder %s10, 0
    %p119 = por %p117, %p118
    %p120 = scmp.ne.s32.totalorder %s109, %s112
    %p121 = scmp.eq.s32.totalorder %s15, 1
    %p122 = por %p120, %p121
    %p123 = scmp.ne.s32.totalorder %s112, %s113
    %p124 = scmp.eq.s32.totalorder %s15, 0
    %p125 = por %p123, %p124
    %p126 = scmp.ne.s32.totalorder %s112, %s113
    %p127 = scmp.eq.s32.totalorder %s16, 1
    %p128 = por %p126, %p127
    %p130 = scmp.ne.s32.totalorder %s113, %s129
    %p131 = scmp.eq.s32.totalorder %s16, 0
    %p132 = por %p130, %p131
    %p133 = scmp.le.s32.totalorder 1, %s10
    %p134 = scmp.lt.s32.totalorder %s10, 3
    %p135 = pnand %p133, %p134
    %p136 = pneg %p135
    // Predicated region
    $region9: #{residual_block.1} parent=5 // pred_check
      _
    $region10: #{residual_block.1} parent=5 // pred_check_branch
      %138 = sbr.rel (%p135) target = $region12
    $region11: #{residual_block.1} parent=5 // pred_region
      %s139 = ssub.s32 %s10, 1
      // Predicated region
      $region13: #{residual_block.1} parent=11 // pred_check
        %p140 = pneg %p57
      $region14: #{residual_block.1} parent=11 // pred_check_branch
        %142 = sbr.rel (%p140) target = $region16
      $region15: #{residual_block.1} parent=11 // pred_region
        _
      $region16: #{residual_block.1} parent=11 // pred_fallthru
        _
      // Predicated region
      $region17: #{residual_block.1} parent=11 // pred_check
        %p143 = pneg %p78
      $region18: #{residual_block.1} parent=11 // pred_check_branch
        %145 = sbr.rel (%p143) target = $region20
      $region19: #{residual_block.1} parent=11 // pred_region
        _
      $region20: #{residual_block.1} parent=11 // pred_fallthru
        _
      // Predicated region
      $region21: #{residual_block.1} parent=11 // pred_check
        %p146 = pneg %p99
      $region22: #{residual_block.1} parent=11 // pred_check_branch
        %148 = sbr.rel (%p146) target = $region24
      $region23: #{residual_block.1} parent=11 // pred_region
        _
      $region24: #{residual_block.1} parent=11 // pred_fallthru
        _
    $region12: #{residual_block.1} parent=5 // pred_fallthru
      _
    %p149 = scmp.lt.s32.totalorder %s10, 2
    // Predicated region
    $region25: #{residual_block.1} parent=5 // pred_check
      %p150 = pneg %p149
    $region26: #{residual_block.1} parent=5 // pred_check_branch
      %152 = sbr.rel (%p150) target = $region28
    $region27: #{residual_block.1} parent=5 // pred_region
      // Predicated region
      $region29: #{residual_block.1} parent=27 // pred_check
        %p153 = pneg %p30
      $region30: #{residual_block.1} parent=27 // pred_check_branch
        %155 = sbr.rel (%p153) target = $region32
      $region31: #{residual_block.1} parent=27 // pred_region
        %p156 = scmp.lt.s32.totalorder %s10, 1
        %s157 = scalar_select %p156, %s10, 1
        %s158 = smul.addr %s157, 8
        %s159 = scalar_lea.vmem %s0, %s158
      $region32: #{residual_block.1} parent=27 // pred_fallthru
        _
    $region28: #{residual_block.1} parent=5 // pred_fallthru
      _
    %p160 = scmp.le.s32.totalorder 1, %s10
    %p161 = scmp.lt.s32.totalorder %s10, 3
    %p162 = pnand %p160, %p161
    %p163 = pneg %p162
    // Predicated region
    $region33: #{residual_block.1} parent=5 // pred_check
      _
    $region34: #{residual_block.1} parent=5 // pred_check_branch
      %165 = sbr.rel (%p162) target = $region36
    $region35: #{residual_block.1} parent=5 // pred_region
      %s166 = ssub.s32 %s10, 1
      %p167 = scmp.lt.s32.totalorder %s15, 1
      %s168 = scalar_select %p167, %s15, 1
      %s169 = smul.addr %s168, 8
      %s170 = scalar_lea.vmem %s0, %s169
      %p171 = pneg %p36
      %p172 = pneg %p33
      %p173 = pneg %p57
      %p174 = pneg %p54
      %p175 = pneg %p78
      %p176 = pneg %p75
      %p177 = pneg %p99
      %p178 = pneg %p96
      %p179 = pneg %p125
      %p180 = pneg %p122
      %p181 = scmp.lt.s32.totalorder %s15, 1
      %s182 = scalar_select %p181, %s15, 1
      %s183 = smul.addr %s182, 8
      %s184 = scalar_lea.vmem %s4, %s183
      %p185 = scmp.lt.s32.totalorder %s15, 1
      %s186 = scalar_select %p185, %s15, 1
      %s187 = smul.addr %s186, 8
      %s188 = scalar_lea.vmem %s0, %s187
      %p189 = scmp.lt.s32.totalorder %s15, 1
      %s190 = scalar_select %p189, %s15, 1
      %s191 = smul.addr %s190, 8
      %s192 = scalar_lea.vmem %s4, %s191
      %v193 = vld [vmem:[%s1] sm:$0xff]
      %v194 = vld [vmem:[%s2] sm:$0xff]
      %v195 = vld [vmem:[%s2 + $0x8] sm:$0xff]
      %v196 = vld [vmem:[%s2 + $0x10] sm:$0xff]
      %v197 = vld [vmem:[%s2 + $0x18] sm:$0xff]
      %v198 = vld [vmem:[%s2 + $0x20] sm:$0xff]
      %v199 = vld [vmem:[%s2 + $0x28] sm:$0xff]
      %v200 = vld [vmem:[%s2 + $0x30] sm:$0xff]
      %v201 = vld [vmem:[%s2 + $0x38] sm:$0xff]
      %v202 = vld [vmem:[%s2 + $0x40] sm:$0xff]
      %v203 = vld [vmem:[%s2 + $0x48] sm:$0xff]
      %v204 = vld [vmem:[%s2 + $0x50] sm:$0xff]
      %v205 = vld [vmem:[%s2 + $0x58] sm:$0xff]
      %v206 = vld [vmem:[%s2 + $0x60] sm:$0xff]
      %v207 = vld [vmem:[%s2 + $0x68] sm:$0xff]
      %v208 = vld [vmem:[%s2 + $0x70] sm:$0xff]
      %v209 = vld [vmem:[%s2 + $0x78] sm:$0xff]
      %v210 = vld [vmem:[%s3] sm:$0xff]
      %v211 = vld [vmem:[%s3 + $0x8] sm:$0xff]
      %v212 = vld [vmem:[%s3 + $0x10] sm:$0xff]
      %v213 = vld [vmem:[%s3 + $0x18] sm:$0xff]
      %v214 = vld [vmem:[%s3 + $0x20] sm:$0xff]
      %v215 = vld [vmem:[%s3 + $0x28] sm:$0xff]
      %v216 = vld [vmem:[%s3 + $0x30] sm:$0xff]
      %v217 = vld [vmem:[%s3 + $0x38] sm:$0xff]
      %v218 = vld [vmem:[%s3 + $0x40] sm:$0xff]
      %v219 = vld [vmem:[%s3 + $0x48] sm:$0xff]
      %v220 = vld [vmem:[%s3 + $0x50] sm:$0xff]
      %v221 = vld [vmem:[%s3 + $0x58] sm:$0xff]
      %v222 = vld [vmem:[%s3 + $0x60] sm:$0xff]
      %v223 = vld [vmem:[%s3 + $0x68] sm:$0xff]
      %v224 = vld [vmem:[%s3 + $0x70] sm:$0xff]
      %v225 = vld [vmem:[%s3 + $0x78] sm:$0xff]
      %v226 = vld [vmem:[%s188] sm:$0xff]
      %227 = vadd.xlane.f32.xlu0 %v226
      %v228 = vpop.xlane.xlu0 %227
      %v229 = vmul.f32 %v228, 0.03125
      %v230 = vsub.f32 %v226, %v229
      %v231 = vmul.f32 %v230, %v230
      %232 = vadd.xlane.f32.xlu0 %v231
      %v233 = vpop.xlane.xlu0 %232
      %v234 = vmul.f32 %v229, %v229
      %v235 = vmul.f32 %v234, 96.0
      %v236 = vsub.f32 %v233, %v235
      %v237 = vmul.f32 %v236, 0.03125
      %v238 = vmax.f32 %v237, 0.0
      %v239 = vadd.f32 %v238, 1e-05
      %v240 = vrsqrt.pop %v239
      %v241 = vmul.f32 %v230, %v240
      %v242 = vlaneseq
      %v243 = vshrl.u32 %v242, 7
      %v244 = vsub.s32 0, %v243
      %v245 = vrot.slane %v193, %v244
      %v246 = vmul.f32 %v241, %v245
      %v247 = vlaneseq
      %v248 = vshrl.u32 %v247, 7
      %v249 = vsub.s32 1, %v248
      %v250 = vrot.slane %v193, %v249
      %v251 = vadd.f32 %v246, %v250
      %v252 = vmax.f32 %v251, 0.0
      %v253 = vlaneseq
      %v254 = vshrl.u32 %v253, 7
      %v255 = vsub.s32 2, %v254
      %v256 = vrot.slane %v193, %v255
      %257 = vmatprep.subr.mxu0 0.0
      %258 = vmatpush1.msra.mxu0 %v194
      %259 = vmatprep.subr.mxu0 0.0
      %260 = vmatpush1.msra.mxu0 %v195
      %261 = vmatprep.subr.mxu0 0.0
      %262 = vmatpush1.msra.mxu0 %v196
      %263 = vmatprep.subr.mxu0 0.0
      %264 = vmatpush1.msra.mxu0 %v197
      %265 = vmatprep.subr.mxu0 0.0
      %266 = vmatpush1.msra.mxu0 %v198
      %267 = vmatprep.subr.mxu0 0.0
      %268 = vmatpush1.msra.mxu0 %v199
      %269 = vmatprep.subr.mxu0 0.0
      %270 = vmatpush1.msra.mxu0 %v200
      %271 = vmatprep.subr.mxu0 0.0
      %272 = vmatpush1.msra.mxu0 %v201
      %273 = vmatprep.subr.mxu0 0.0
      %274 = vmatpush1.msra.mxu0 %v202
      %275 = vmatprep.subr.mxu0 0.0
      %276 = vmatpush1.msra.mxu0 %v203
      %277 = vmatprep.subr.mxu0 0.0
      %278 = vmatpush1.msra.mxu0 %v204
      %279 = vmatprep.subr.mxu0 0.0
      %280 = vmatpush1.msra.mxu0 %v205
      %281 = vmatprep.subr.mxu0 0.0
      %282 = vmatpush1.msra.mxu0 %v206
      %283 = vmatprep.subr.mxu0 0.0
      %284 = vmatpush1.msra.mxu0 %v207
      %285 = vmatprep.subr.mxu0 0.0
      %286 = vmatpush1.msra.mxu0 %v208
      %287 = vmatprep.subr.mxu0 0.0
      %288 = vmatpush1.msra.mxu0 %v209
      %289 = vmatprep.subr.mxu0 0.0
      %290 = vmatpush1.msra.mxu0 0.0
      %291 = vmatprep.subr.mxu0 0.0
      %292 = vmatpush1.msra.mxu0 0.0
      %293 = vmatprep.subr.mxu0 0.0
      %294 = vmatpush1.msra.mxu0 0.0
      %295 = vmatprep.subr.mxu0 0.0
      %296 = vmatpush1.msra.mxu0 0.0
      %297 = vmatprep.subr.mxu0 0.0
      %298 = vmatpush1.msra.mxu0 0.0
      %299 = vmatprep.subr.mxu0 0.0
      %300 = vmatpush1.msra.mxu0 0.0
      %301 = vmatprep.subr.mxu0 0.0
      %302 = vmatpush1.msra.mxu0 0.0
      %303 = vmatprep.subr.mxu0 0.0
      %304 = vmatpush1.msra.mxu0 0.0
      %305 = vmatprep.subr.mxu0 0.0
      %306 = vmatpush1.msra.mxu0 0.0
      %307 = vmatprep.subr.mxu0 0.0
      %308 = vmatpush1.msra.mxu0 0.0
      %309 = vmatprep.subr.mxu0 0.0
      %310 = vmatpush1.msra.mxu0 0.0
      %311 = vmatprep.subr.mxu0 0.0
      %312 = vmatpush1.msra.mxu0 0.0
      %313 = vmatprep.subr.mxu0 0.0
      %314 = vmatpush1.msra.mxu0 0.0
      %315 = vmatprep.subr.mxu0 0.0
      %316 = vmatpush1.msra.mxu0 0.0
      %317 = vmatprep.subr.mxu0 0.0
      %318 = vmatpush1.msra.mxu0 0.0
      %319 = vmatprep.subr.mxu0 0.0
      %320 = vmatpush1.msra.mxu0 0.0
      %321 = vmatprep.mubr.f32.mxu0 0.0
      %322 = vmatmul.mubr.f32.gmra.mrb[0].mxu0 %v252
      %v323 = vpop.f32.mrb[0].mxu0
      %v324 = vadd.f32 %v256, %v323
      %v325 = vpop.f32.mrb[0].mxu0
      %326 = vdwg.mxu0
      %327 = vadd.xlane.f32.xlu0 %v324
      %v328 = vpop.xlane.xlu0 %327
      %v329 = vmul.f32 %v328, 0.03125
      %v330 = vsub.f32 %v324, %v329
      %v331 = vmul.f32 %v330, %v330
      %332 = vadd.xlane.f32.xlu0 %v331
      %v333 = vpop.xlane.xlu0 %332
      %v334 = vmul.f32 %v329, %v329
      %v335 = vmul.f32 %v334, 96.0
      %v336 = vsub.f32 %v333, %v335
      %v337 = vmul.f32 %v336, 0.03125
      %v338 = vmax.f32 %v337, 0.0
      %v339 = vadd.f32 %v338, 1e-05
      %v340 = vrsqrt.pop %v339
      %v341 = vmul.f32 %v330, %v340
      %v342 = vlaneseq
      %v343 = vshrl.u32 %v342, 7
      %v344 = vsub.s32 3, %v343
      %v345 = vrot.slane %v193, %v344
      %v346 = vmul.f32 %v341, %v345
      %v347 = vlaneseq
      %v348 = vshrl.u32 %v347, 7
      %v349 = vsub.s32 4, %v348
      %v350 = vrot.slane %v193, %v349
      %v351 = vadd.f32 %v346, %v350
      %v352 = vmax.f32 %v351, 0.0
      %v353 = vlaneseq
      %v354 = vshrl.u32 %v353, 7
      %v355 = vsub.s32 5, %v354
      %v356 = vrot.slane %v193, %v355
      %357 = vmatprep.subr.mxu0 0.0
      %358 = vmatpush1.msra.mxu0 %v210
      %359 = vmatprep.subr.mxu0 0.0
      %360 = vmatpush1.msra.mxu0 %v211
      %361 = vmatprep.subr.mxu0 0.0
      %362 = vmatpush1.msra.mxu0 %v212
      %363 = vmatprep.subr.mxu0 0.0
      %364 = vmatpush1.msra.mxu0 %v213
      %365 = vmatprep.subr.mxu0 0.0
      %366 = vmatpush1.msra.mxu0 %v214
      %367 = vmatprep.subr.mxu0 0.0
      %368 = vmatpush1.msra.mxu0 %v215
      %369 = vmatprep.subr.mxu0 0.0
      %370 = vmatpush1.msra.mxu0 %v216
      %371 = vmatprep.subr.mxu0 0.0
      %372 = vmatpush1.msra.mxu0 %v217
      %373 = vmatprep.subr.mxu0 0.0
      %374 = vmatpush1.msra.mxu0 %v218
      %375 = vmatprep.subr.mxu0 0.0
      %376 = vmatpush1.msra.mxu0 %v219
      %377 = vmatprep.subr.mxu0 0.0
      %378 = vmatpush1.msra.mxu0 %v220
      %379 = vmatprep.subr.mxu0 0.0
      %380 = vmatpush1.msra.mxu0 %v221
      %381 = vmatprep.subr.mxu0 0.0
      %382 = vmatpush1.msra.mxu0 %v222
      %383 = vmatprep.subr.mxu0 0.0
      %384 = vmatpush1.msra.mxu0 %v223
      %385 = vmatprep.subr.mxu0 0.0
      %386 = vmatpush1.msra.mxu0 %v224
      %387 = vmatprep.subr.mxu0 0.0
      %388 = vmatpush1.msra.mxu0 %v225
      %389 = vmatprep.subr.mxu0 0.0
      %390 = vmatpush1.msra.mxu0 0.0
      %391 = vmatprep.subr.mxu0 0.0
      %392 = vmatpush1.msra.mxu0 0.0
      %393 = vmatprep.subr.mxu0 0.0
      %394 = vmatpush1.msra.mxu0 0.0
      %395 = vmatprep.subr.mxu0 0.0
      %396 = vmatpush1.msra.mxu0 0.0
      %397 = vmatprep.subr.mxu0 0.0
      %398 = vmatpush1.msra.mxu0 0.0
      %399 = vmatprep.subr.mxu0 0.0
      %400 = vmatpush1.msra.mxu0 0.0
      %401 = vmatprep.subr.mxu0 0.0
      %402 = vmatpush1.msra.mxu0 0.0
      %403 = vmatprep.subr.mxu0 0.0
      %404 = vmatpush1.msra.mxu0 0.0
      %405 = vmatprep.subr.mxu0 0.0
      %406 = vmatpush1.msra.mxu0 0.0
      %407 = vmatprep.subr.mxu0 0.0
      %408 = vmatpush1.msra.mxu0 0.0
      %409 = vmatprep.subr.mxu0 0.0
      %410 = vmatpush1.msra.mxu0 0.0
      %411 = vmatprep.subr.mxu0 0.0
      %412 = vmatpush1.msra.mxu0 0.0
      %413 = vmatprep.subr.mxu0 0.0
      %414 = vmatpush1.msra.mxu0 0.0
      %415 = vmatprep.subr.mxu0 0.0
      %416 = vmatpush1.msra.mxu0 0.0
      %417 = vmatprep.subr.mxu0 0.0
      %418 = vmatpush1.msra.mxu0 0.0
      %419 = vmatprep.subr.mxu0 0.0
      %420 = vmatpush1.msra.mxu0 0.0
      %421 = vmatprep.mubr.f32.mxu0 0.0
      %422 = vmatmul.mubr.f32.gmra.mrb[0].mxu0 %v352
      %v423 = vpop.f32.mrb[0].mxu0
      %v424 = vadd.f32 %v356, %v423
      %v425 = vpop.f32.mrb[0].mxu0
      %426 = vdwg.mxu0
      %v427 = vadd.f32 %v226, %v424
      %428 = vst [vmem:[%s192] sm:$0xff] %v427
      %p429 = scmp.lt.s32.totalorder %s15, 1
      %s430 = scalar_select %p429, %s15, 1
      %s431 = smul.addr %s430, 8
      %s432 = scalar_lea.vmem %s4, %s431
      // Predicated region
      $region37: #{residual_block.1} parent=35 // pred_check
        %p433 = pneg %p122
      $region38: #{residual_block.1} parent=35 // pred_check_branch
        %435 = sbr.rel (%p433) target = $region40
      $region39: #{residual_block.1} parent=35 // pred_region
        _
      $region40: #{residual_block.1} parent=35 // pred_fallthru
        _
    $region36: #{residual_block.1} parent=5 // pred_fallthru
      _
    %p436 = scmp.le.s32.totalorder 2, %s10
    // Predicated region
    $region41: #{residual_block.1} parent=5 // pred_check
      %p437 = pneg %p436
    $region42: #{residual_block.1} parent=5 // pred_check_branch
      %439 = sbr.rel (%p437) target = $region44
    $region43: #{residual_block.1} parent=5 // pred_region
      %s440 = ssub.s32 %s10, 2
      // Predicated region
      $region45: #{residual_block.1} parent=43 // pred_check
        %p441 = pneg %p128
      $region46: #{residual_block.1} parent=43 // pred_check_branch
        %443 = sbr.rel (%p441) target = $region48
      $region47: #{residual_block.1} parent=43 // pred_region
        %p444 = scmp.lt.s32.totalorder %s16, 1
        %s445 = scalar_select %p444, %s16, 1
        %s446 = smul.addr %s445, 8
        %s447 = scalar_lea.vmem %s4, %s446
      $region48: #{residual_block.1} parent=43 // pred_fallthru
        _
    $region44: #{residual_block.1} parent=5 // pred_fallthru
      _
  $region6: #{residual_block.1} parent=0 // loop_footer
    %s14 = sadd.s32 1, %s10
  $region7: #{residual_block.1} parent=0 // loop_footer_branch
    %9 = sbr.rel target = $region3
  $region8: #{residual_block.1} parent=0 // loop_exit
    _

</llo_original>
